<compile_context>
chip_gen: v7x
topology: tpu7x:2x2x1
jax: 0.10.0
libtpu: 0.0.40
codegen_flags: <defaults>
</compile_context>

<pallas_src>
import functools

import jax
import jax.numpy as jnp
import numpy as np
from jax.experimental import pallas as pl
from jax.experimental.pallas import tpu as pltpu


def _round_up(x, m):
    return (x + m - 1) // m * m


def _cdiv(a, b):
    return -(-a // b)


def _vmem_limit_bytes():
    # Generation-aware ceiling: ~75% of physical VMEM (48 MiB on v7x's 64 MiB,
    # 96 MiB on v5e/v6e's 128 MiB), leaving headroom for compiler scratch.
    try:
        cap = pltpu.get_tpu_info().vmem_capacity_bytes
    except Exception:
        cap = 85 * 1024 * 1024  # conservative fallback (previous 64 MiB ran clean)
    return int(min(cap * 3 // 4, 100 * 1024 * 1024))


def _const_spec(block_shape, index_map):
    """Grid-invariant block: single-buffer it (no point double-buffering a block
    whose index_map is constant).  Falls back gracefully on older APIs."""
    try:
        return pl.BlockSpec(block_shape, index_map, pipeline_mode=pl.Buffered(1))
    except (TypeError, AttributeError):
        return pl.BlockSpec(block_shape, index_map)


def _awq_conv_kernel(p_ref, x_ref, w_ref, b_ref, y_ref, amax_ref):
    """Grid = (batch, output-pixel chunk); every output block is per-(n, chunk),
    so both axes are fully parallel (no resident accumulator).

    p_ref:    (T_HW, K_pad)      lane-dense im2col patches for this chunk
    x_ref:    (T_X, Cin)         raw activations slab (f32) for the amax path
    w_ref:    (K_pad, Cout_pad)  im2col-ordered weight (grid-invariant)
    b_ref:    (1, Cout_pad)      bias (zeros when the module has no bias)
    y_ref:    (T_HW, Cout_pad)   lane-dense conv output chunk
    amax_ref: (8, Cin)           per-in-channel |x| max partial for this block
    """
    # ---- per-in-channel abs-max partial (always f32; zero padding rows are
    # harmless because |x| >= 0).  Broadcast over 8 sublanes -> full-tile store.
    amax_ref[...] = jnp.broadcast_to(
        jnp.max(jnp.abs(x_ref[...]), axis=0, keepdims=True), amax_ref.shape)

    # ---- single MXU matmul over the K-padded contraction, f32 accumulation,
    # fused bias epilogue.  No in-kernel relayout work at all.
    acc = jnp.dot(p_ref[...], w_ref[...], preferred_element_type=jnp.float32)
    y_ref[...] = (acc + b_ref[...]).astype(y_ref.dtype)


def awq_observer_forward(x_nchw, weight_oihw, act_scales, *,
                         stride=(1, 1), padding=(1, 1), dilation=(1, 1),
                         groups=1, bias=None, use_bf16_matmul=True,
                         block_hw=512):
    """Returns (y_nchw, new_act_scales) — conv output + updated observer buffer.

    use_bf16_matmul=True rounds the conv *operands* to bf16 (f32 accumulation);
    acceptable for AWQ calibration, and the act_scales path stays exact f32.
    """
    assert groups == 1  # TODO(synk): grouped/depthwise convolution not implemented in this kernel.
    N, C_in, H, W = x_nchw.shape
    C_out, _, KH, KW = weight_oihw.shape
    sh, sw = stride
    ph, pw = padding
    dh, dw = dilation
    H_out = (H + 2 * ph - dh * (KH - 1) - 1) // sh + 1
    W_out = (W + 2 * pw - dw * (KW - 1) - 1) // sw + 1
    HW = H_out * W_out
    HW_x = H * W
    K = C_in * KH * KW

    # Lane/contraction padding: K to 128 (256 when large, for the 256-wide MXU
    # on v6e/v7x); Cout to 128 for unmasked output stores.
    K_pad = _round_up(K, 256 if K > 128 else 128)
    C_out_pad = _round_up(C_out, 128)

    # Tile output pixels so per-step VMEM stays bounded (v7x: 64 MiB) and the
    # pipeline has many steps to hide DMA.  T multiple of 16 (bf16 sublanes).
    T = min(_round_up(block_hw, 16), _round_up(HW, 16))
    n_hw = _cdiv(HW, T)
    HW_pad = n_hw * T
    T_X = _round_up(_cdiv(HW_x, n_hw), 8)
    HWx_pad = n_hw * T_X

    mx_dtype = jnp.bfloat16 if use_bf16_matmul else jnp.float32

    # ---- wrapper-side glue (layout only, no compute duplication in-kernel) ----
    # TODO(synk): production calibration would keep activations NHWC end-to-end and
    # let the consumer take NHWC output, dropping both relayout passes below.
    x_nhwc = jnp.transpose(x_nchw, (0, 2, 3, 1)).astype(jnp.float32)

    # im2col done once by XLA: (N, H_out, W_out, Cin*KH*KW), taps ordered
    # channel-major (ci, kh, kw).  Cast + pad once -> lane-dense MXU operand.
    patches = jax.lax.conv_general_dilated_patches(
        x_nhwc, filter_shape=(KH, KW), window_strides=(sh, sw),
        padding=((ph, ph), (pw, pw)), rhs_dilation=(dh, dw),
        dimension_numbers=("NHWC", "HWIO", "NHWC"))
    patches = patches.reshape(N, HW, K).astype(mx_dtype)
    patches = jnp.pad(patches, ((0, 0), (0, HW_pad - HW), (0, K_pad - K)))

    # Raw activations (f32) for the exact amax path, padded with zeros (|x|>=0).
    x_flat = jnp.pad(x_nhwc.reshape(N, HW_x, C_in),
                     ((0, 0), (0, HWx_pad - HW_x), (0, 0)))

    # Weight -> (K, Cout) in the same (ci, kh, kw) order as the patches feature
    # axis; cast to bf16 ONCE here (not per grid step in the kernel).
    w2 = jnp.transpose(weight_oihw, (1, 2, 3, 0)).reshape(K, C_out).astype(mx_dtype)
    w2 = jnp.pad(w2, ((0, K_pad - K), (0, C_out_pad - C_out)))
    b = jnp.zeros((C_out,), jnp.float32) if bias is None else bias.astype(jnp.float32)
    b2 = jnp.pad(b, (0, C_out_pad - C_out)).reshape(1, C_out_pad)

    itemsize = jnp.dtype(mx_dtype).itemsize
    flops = 2 * N * HW_pad * K_pad * C_out_pad
    bytes_accessed = (patches.size * itemsize + x_flat.size * 4
                      + w2.size * itemsize + b2.size * 4
                      + N * HW_pad * C_out_pad * 4 + N * n_hw * 8 * C_in * 4)

    y_pad, amax_nb = pl.pallas_call(
        _awq_conv_kernel,
        out_shape=(
            jax.ShapeDtypeStruct((N, HW_pad, C_out_pad), x_nchw.dtype),
            jax.ShapeDtypeStruct((N, n_hw, 8, C_in), jnp.float32),
        ),
        grid_spec=pltpu.PrefetchScalarGridSpec(
            num_scalar_prefetch=0,
            grid=(N, n_hw),
            in_specs=[
                pl.BlockSpec((None, T, K_pad), lambda n, t: (n, t, 0)),
                pl.BlockSpec((None, T_X, C_in), lambda n, t: (n, t, 0)),
                _const_spec((K_pad, C_out_pad), lambda n, t: (0, 0)),
                _const_spec((1, C_out_pad), lambda n, t: (0, 0)),
            ],
            out_specs=[
                pl.BlockSpec((None, T, C_out_pad), lambda n, t: (n, t, 0)),
                pl.BlockSpec((None, None, 8, C_in), lambda n, t: (n, t, 0, 0)),
            ],
        ),
        compiler_params=pltpu.CompilerParams(
            dimension_semantics=("parallel", "parallel"),   # no resident state
            vmem_limit_bytes=_vmem_limit_bytes()),
        cost_estimate=pl.CostEstimate(
            flops=flops, transcendentals=0, bytes_accessed=int(bytes_accessed)),
    )(patches, x_flat, w2, b2)

    # Un-pad / re-layout the conv output back to PyTorch's NCHW.
    y_nchw = jnp.transpose(
        y_pad[:, :HW, :C_out].reshape(N, H_out, W_out, C_out), (0, 3, 1, 2))
    # Final observer-scale reduction over (batch, chunk) partials + old buffer.
    new_scales = jnp.maximum(act_scales, jnp.max(amax_nb, axis=(0, 1, 2)))
    return y_nchw, new_scales
    # TODO(synk): PyTorch's `self.inputs.append(x)` is host-side Python state with no kernel equivalent.


if __name__ == "__main__":
    # AWQObserver(in_channels=4, out_channels=8, kernel_size=(3,3), stride=1, padding=1, bias=False)
    N, C_in, C_out, H, W = 2, 4, 8, 16, 16
    KH, KW = 3, 3

    key = jax.random.PRNGKey(0)
    kx, kw_ = jax.random.split(key)
    x = jax.random.normal(kx, (N, C_in, H, W), dtype=jnp.float32)              # NCHW input
    weight = jax.random.normal(kw_, (C_out, C_in, KH, KW), dtype=jnp.float32)  # torch.randn-like buffer
    act_scales = jnp.zeros((C_in,), dtype=jnp.float32)                         # buffer init (zeros)

    common = dict(stride=(1, 1), padding=(1, 1), dilation=(1, 1), groups=1, bias=None)
    fwd_f32 = jax.jit(functools.partial(awq_observer_forward, use_bf16_matmul=False, **common))
    fwd_bf16 = jax.jit(functools.partial(awq_observer_forward, use_bf16_matmul=True, **common))

    y32, s32 = fwd_f32(x, weight, act_scales)
    y16, s16 = fwd_bf16(x, weight, act_scales)   # calibration default (bf16 operands, f32 acc)
    jax.block_until_ready((y32, s32, y16, s16))

    # Reference check (plain JAX) for the conv output and the observer scale update.
    y_ref = jax.lax.conv_general_dilated(
        x, weight, window_strides=(1, 1), padding=((1, 1), (1, 1)),
        lhs_dilation=(1, 1), rhs_dilation=(1, 1),
        dimension_numbers=("NCHW", "OIHW", "NCHW"))
    scales_ref = jnp.maximum(act_scales, jnp.max(jnp.abs(x), axis=(0, 2, 3)))

    assert y32.shape == (N, C_out, H, W)
    assert s32.shape == (C_in,)
    assert np.allclose(np.asarray(y32), np.asarray(y_ref), rtol=1e-3, atol=1e-3)
    assert np.allclose(np.asarray(s32), np.asarray(scales_ref), rtol=1e-5, atol=1e-5)
    # bf16 operands round the conv numerics (documented; scales remain exact f32).
    assert np.allclose(np.asarray(y16), np.asarray(y_ref), rtol=5e-2, atol=5e-1)
    assert np.allclose(np.asarray(s16), np.asarray(scales_ref), rtol=1e-5, atol=1e-5)
    print("KERNEL_OK")
</pallas_src>

<mosaic_0001>
module attributes {stable_mosaic.version = 11 : i64} {
  func.func @_awq_conv_kernel(%arg0: i32, %arg1: i32, %arg2: memref<1x256x128xf32, #tpu.memory_space<vmem>>, %arg3: memref<1x256x4xf32, #tpu.memory_space<vmem>>, %arg4: memref<128x128xf32, #tpu.memory_space<vmem>>, %arg5: memref<1x128xf32, #tpu.memory_space<vmem>>, %arg6: memref<1x256x128xf32, #tpu.memory_space<vmem>>, %arg7: memref<1x1x8x4xf32, #tpu.memory_space<vmem>>) attributes {dimension_semantics = [#tpu.dimension_semantics<parallel>, #tpu.dimension_semantics<parallel>], iteration_bounds = array<i64: 2, 1>, scalar_prefetch = 0 : i64, scratch_operands = 0 : i64, tpu.core_type = #tpu.core_type<tc>, window_params = [{transform_indices = @transform_0, window_bounds = array<i64: 1, 256, 128>}, {transform_indices = @transform_1, window_bounds = array<i64: 1, 256, 4>}, {pipeline_mode = #tpu.pipeline_mode<synchronous>, transform_indices = @transform_2, window_bounds = array<i64: 128, 128>}, {pipeline_mode = #tpu.pipeline_mode<synchronous>, transform_indices = @transform_3, window_bounds = array<i64: 1, 128>}, {transform_indices = @transform_4, window_bounds = array<i64: 1, 256, 128>}, {transform_indices = @transform_5, window_bounds = array<i64: 1, 1, 8, 4>}]} {
    %c0 = arith.constant 0 : index
    %c0_0 = arith.constant 0 : index
    %c0_1 = arith.constant 0 : index
    %0 = vector.load %arg3[%c0, %c0_0, %c0_1] : memref<1x256x4xf32, #tpu.memory_space<vmem>>, vector<1x256x4xf32>
    %1 = vector.shape_cast %0 : vector<1x256x4xf32> to vector<256x4xf32>
    %2 = math.absf %1 : vector<256x4xf32>
    %cst = arith.constant dense<0xFF800000> : vector<4xf32>
    %3 = vector.multi_reduction <maximumf>, %2, %cst [0] : vector<256x4xf32> to vector<4xf32>
    %4 = vector.shape_cast %3 : vector<4xf32> to vector<1x4xf32>
    %5 = vector.shape_cast %4 : vector<1x4xf32> to vector<1x4xf32>
    %6 = vector.broadcast %5 : vector<1x4xf32> to vector<8x4xf32>
    %c0_2 = arith.constant 0 : index
    %c0_3 = arith.constant 0 : index
    %c0_4 = arith.constant 0 : index
    %c0_5 = arith.constant 0 : index
    %7 = vector.load %arg7[%c0_2, %c0_3, %c0_4, %c0_5] : memref<1x1x8x4xf32, #tpu.memory_space<vmem>>, vector<1x1x8x4xf32>
    %8 = vector.shape_cast %7 : vector<1x1x8x4xf32> to vector<8x4xf32>
    %9 = vector.shape_cast %6 : vector<8x4xf32> to vector<1x1x8x4xf32>
    tpu.vector_store %arg7[%c0_2, %c0_3, %c0_4, %c0_5], %9 {strides = array<i32>} : memref<1x1x8x4xf32, #tpu.memory_space<vmem>>, vector<1x1x8x4xf32>,
    %c0_6 = arith.constant 0 : index
    %c0_7 = arith.constant 0 : index
    %c0_8 = arith.constant 0 : index
    %10 = vector.load %arg2[%c0_6, %c0_7, %c0_8] : memref<1x256x128xf32, #tpu.memory_space<vmem>>, vector<1x256x128xf32>
    %11 = vector.shape_cast %10 : vector<1x256x128xf32> to vector<256x128xf32>
    %c0_9 = arith.constant 0 : index
    %c0_10 = arith.constant 0 : index
    %12 = vector.load %arg4[%c0_9, %c0_10] : memref<128x128xf32, #tpu.memory_space<vmem>>, vector<128x128xf32>
    %cst_11 = arith.constant dense<0.000000e+00> : vector<256x128xf32>
    %13 = tpu.matmul %11, %12, %cst_11 {dimension_numbers = #tpu.dot_dimension_numbers<[1], [0], [0], [1], [0, 0, 1, 1], [], []>} : vector<256x128xf32>, vector<128x128xf32>, vector<256x128xf32> -> vector<256x128xf32>
    %c0_12 = arith.constant 0 : index
    %c0_13 = arith.constant 0 : index
    %14 = vector.load %arg5[%c0_12, %c0_13] : memref<1x128xf32, #tpu.memory_space<vmem>>, vector<1x128xf32>
    %15 = vector.broadcast %14 : vector<1x128xf32> to vector<256x128xf32>
    %16 = arith.addf %13, %15 : vector<256x128xf32>
    %c0_14 = arith.constant 0 : index
    %c0_15 = arith.constant 0 : index
    %c0_16 = arith.constant 0 : index
    %17 = vector.load %arg6[%c0_14, %c0_15, %c0_16] : memref<1x256x128xf32, #tpu.memory_space<vmem>>, vector<1x256x128xf32>
    %18 = vector.shape_cast %17 : vector<1x256x128xf32> to vector<256x128xf32>
    %19 = vector.shape_cast %16 : vector<256x128xf32> to vector<1x256x128xf32>
    tpu.vector_store %arg6[%c0_14, %c0_15, %c0_16], %19 {strides = array<i32>} : memref<1x256x128xf32, #tpu.memory_space<vmem>>, vector<1x256x128xf32>,
    return
  }
  func.func @transform_0(%arg0: i32, %arg1: i32) -> (i32, i32, i32) {
    %c0_i32 = arith.constant 0 : i32
    %c0_i32_0 = arith.constant 0 : i32
    return %arg0, %arg1, %c0_i32 : i32, i32, i32
  }
  func.func @transform_1(%arg0: i32, %arg1: i32) -> (i32, i32, i32) {
    %c0_i32 = arith.constant 0 : i32
    %c0_i32_0 = arith.constant 0 : i32
    return %arg0, %arg1, %c0_i32 : i32, i32, i32
  }
  func.func @transform_2(%arg0: i32, %arg1: i32) -> (i32, i32) {
    %c0_i32 = arith.constant 0 : i32
    %c0_i32_0 = arith.constant 0 : i32
    %c0_i32_1 = arith.constant 0 : i32
    return %c0_i32, %c0_i32_0 : i32, i32
  }
  func.func @transform_3(%arg0: i32, %arg1: i32) -> (i32, i32) {
    %c0_i32 = arith.constant 0 : i32
    %c0_i32_0 = arith.constant 0 : i32
    %c0_i32_1 = arith.constant 0 : i32
    return %c0_i32, %c0_i32_0 : i32, i32
  }
  func.func @transform_4(%arg0: i32, %arg1: i32) -> (i32, i32, i32) {
    %c0_i32 = arith.constant 0 : i32
    %c0_i32_0 = arith.constant 0 : i32
    return %arg0, %arg1, %c0_i32 : i32, i32, i32
  }
  func.func @transform_5(%arg0: i32, %arg1: i32) -> (i32, i32, i32, i32) {
    %c0_i32 = arith.constant 0 : i32
    %c0_i32_0 = arith.constant 0 : i32
    %c0_i32_1 = arith.constant 0 : i32
    return %arg0, %arg1, %c0_i32, %c0_i32_0 : i32, i32, i32, i32
  }
}

</mosaic_0001>

<llo_original>
// kernel: awq_observer_forward.1
$region0: #{awq_observer_forward.1}
  #allocation0 [shape = 'u32[]', space=smem, size = 0x4, offset = 0x4, fixed_abs, tag = 'smem constant byte address 0x4 - core index']
  #allocation1 [shape = 'u32[144,128]{1,0:T(1,128)}', space=vmem, size = 0x12000, scoped, tag = 'internal scratch']
  %s0 = inlined_call_operand.vmem [shape: f32[2,256,128], index: 0, kind: input, shape index: {}]
  %s1 = inlined_call_operand.hbm [shape: f32[2,256,4], index: 1, kind: input, shape index: {}]
  %s2 = inlined_call_operand.hbm [shape: f32[128,128], index: 2, kind: input, shape index: {}]
  %s3 = inlined_call_operand.hbm [shape: f32[1,128], index: 3, kind: input, shape index: {}]
  %s4 = inlined_call_operand.hbm [shape: f32[2,256,128], index: 4, kind: output, shape index: {0}]
  %s5 = inlined_call_operand.hbm [shape: f32[2,1,8,4], index: 5, kind: output, shape index: {1}]
  %6 = xla_tuple %s4, %s5
  %s7 = sld [smem:[#allocation0]]
  $region69: #{awq_observer_forward.1} parent=0
    _
  %s9 = ssub.s32 1, %s7
  %s10 = scalar_select 0, %s9, %s7
  $region1: #{awq_observer_forward.1} parent=0
    #allocation2 [shape = 'u8[262144]{0}', space=vmem, size = 0x40000, scoped, tag = 'input window, operand 1']
    #allocation3 [shape = 's32[2]{0}', space=sflag, size = 0x8, scoped, tag = 'scoped memory for awq_observer_forward.1']
    #allocation4 [shape = 's32[2]{0}', space=sflag, size = 0x8, scoped, tag = 'scoped memory for awq_observer_forward.1']
    #allocation5 [shape = 'u8[65536]{0}', space=vmem, size = 0x10000, scoped, tag = 'input window, operand 2, single buffered']
    #allocation6 [shape = 's32[1]{0}', space=sflag, size = 0x4, scoped, tag = 'scoped memory for awq_observer_forward.1']
    #allocation7 [shape = 'u8[512]{0}', space=vmem, size = 0x400, scoped, tag = 'input window, operand 3, single buffered']
    #allocation8 [shape = 'u8[262144]{0}', space=vmem, size = 0x40000, scoped, tag = 'output window, operand 0']
    #allocation9 [shape = 'u8[8192]{0}', space=vmem, size = 0x2000, scoped, tag = 'output window, operand 1']
    #allocation10 [shape = 's32[2]{0}', space=sflag, size = 0x8, scoped, tag = 'scoped memory for awq_observer_forward.1']
    %11 = vsyncpa [#allocation3], 0
    %s12 = scalar_lea.sflag [#allocation3], 1
    %13 = vsyncpa %s12, 0
    %14 = vsyncpa [#allocation6], 0
    %15 = vsyncpa [#allocation4], 0
    %s16 = scalar_lea.sflag [#allocation4], 1
    %17 = vsyncpa %s16, 0
    %18 = vsyncpa [#allocation10], 0
    %s19 = scalar_lea.sflag [#allocation10], 1
    %20 = vsyncpa %s19, 0
    loop: start=0, step=1, limit=4
    $region2: #{awq_observer_forward.1} parent=1 // loop_pre_header
      _
    $region3: #{awq_observer_forward.1} parent=1 // loop_header
      %s22 = sphi 0, %s26
      %p23 = scmp.ge.s32.totalorder %s22, 4
      %s29 = sphi 0, %s41
      %s30 = sphi 0, %s37
      %s31 = sphi 0, %s29
      %s32 = sphi 0, %s30
      %s33 = sphi 0, %s31
      %s34 = sphi 0, %s32
      %s46 = sphi 0, %s48
      %s49 = sphi 0, %s46
      %s50 = sphi 0, %s49
      %s66 = sphi 0, %s50
      %s74 = sphi 0, %s76
      %s77 = sphi 0, %s74
      %s78 = sphi 0, %s77
      %s94 = sphi 0, %s78
      %s98 = sphi 0, %s98
      %s100 = sphi 0, %s98
      %s101 = sphi 0, %s100
      %s115 = sphi 0, %s101
      %s119 = sphi 0, %s119
      %s121 = sphi 0, %s119
      %s122 = sphi 0, %s121
      %s136 = sphi 0, %s122
      %s144 = sphi 0, %s146
      %s147 = sphi 0, %s144
      %s148 = sphi 0, %s147
      %s164 = sphi 0, %s148
      %s172 = sphi 0, %s174
      %s175 = sphi 0, %s172
      %s176 = sphi 0, %s175
      %s192 = sphi 0, %s176
    $region4: #{awq_observer_forward.1} parent=1 // loop_header_branch
      %25 = sbr.rel (%p23) target = $region8
    $region5: #{awq_observer_forward.1} parent=1 // loop_body
      %s27 = ssub.s32 %s22, 1
      %s28 = ssub.s32 %s22, 2
      %s35 = sadd.s32 1, %s30
      %p36 = scmp.ge.s32.totalorder %s35, 1
      %s37 = scalar_select %p36, 0, %s35
      %s38 = sadd.s32 1, %s29
      %s39 = scalar_select %p36, %s38, %s29
      %p40 = scmp.ge.s32.totalorder %s39, 2
      %s41 = scalar_select %p40, 0, %s39
      %s42 = ssub.s32 %s29, %s41
      %s43 = ssub.s32 %s30, %s37
      %s44 = sor.u32 %s42, %s43
      %p45 = scmp.eq.s32.totalorder %s44, 0
      %s47 = sadd.s32 %s46, 1
      %s48 = scalar_select %p45, %s46, %s47
      %p51 = pneg %p45
      %p52 = scmp.eq.s32.totalorder %s22, 1
      %p53 = por %p51, %p52
      %p54 = scmp.ne.s32.totalorder %s46, %s49
      %p55 = scmp.eq.s32.totalorder %s22, 0
      %p56 = por %p54, %p55
      %p57 = scmp.ne.s32.totalorder %s46, %s49
      %p58 = scmp.eq.s32.totalorder %s27, 1
      %p59 = por %p57, %p58
      %p60 = scmp.ne.s32.totalorder %s49, %s50
      %p61 = scmp.eq.s32.totalorder %s27, 0
      %p62 = por %p60, %p61
      %p63 = scmp.ne.s32.totalorder %s49, %s50
      %p64 = scmp.eq.s32.totalorder %s28, 1
      %p65 = por %p63, %p64
      %p67 = scmp.ne.s32.totalorder %s50, %s66
      %p68 = scmp.eq.s32.totalorder %s28, 0
      %p69 = por %p67, %p68
      %s70 = ssub.s32 %s29, %s41
      %s71 = ssub.s32 %s30, %s37
      %s72 = sor.u32 %s70, %s71
      %p73 = scmp.eq.s32.totalorder %s72, 0
      %s75 = sadd.s32 %s74, 1
      %s76 = scalar_select %p73, %s74, %s75
      %p79 = pneg %p73
      %p80 = scmp.eq.s32.totalorder %s22, 1
      %p81 = por %p79, %p80
      %p82 = scmp.ne.s32.totalorder %s74, %s77
      %p83 = scmp.eq.s32.totalorder %s22, 0
      %p84 = por %p82, %p83
      %p85 = scmp.ne.s32.totalorder %s74, %s77
      %p86 = scmp.eq.s32.totalorder %s27, 1
      %p87 = por %p85, %p86
      %p88 = scmp.ne.s32.totalorder %s77, %s78
      %p89 = scmp.eq.s32.totalorder %s27, 0
      %p90 = por %p88, %p89
      %p91 = scmp.ne.s32.totalorder %s77, %s78
      %p92 = scmp.eq.s32.totalorder %s28, 1
      %p93 = por %p91, %p92
      %p95 = scmp.ne.s32.totalorder %s78, %s94
      %p96 = scmp.eq.s32.totalorder %s28, 0
      %p97 = por %p95, %p96
      %s99 = sadd.s32 %s98, 1
      %p102 = scmp.eq.s32.totalorder %s22, 1
      %p103 = scmp.ne.s32.totalorder %s98, %s100
      %p104 = scmp.eq.s32.totalorder %s22, 0
      %p105 = por %p103, %p104
      %p106 = scmp.ne.s32.totalorder %s98, %s100
      %p107 = scmp.eq.s32.totalorder %s27, 1
      %p108 = por %p106, %p107
      %p109 = scmp.ne.s32.totalorder %s100, %s101
      %p110 = scmp.eq.s32.totalorder %s27, 0
      %p111 = por %p109, %p110
      %p112 = scmp.ne.s32.totalorder %s100, %s101
      %p113 = scmp.eq.s32.totalorder %s28, 1
      %p114 = por %p112, %p113
      %p116 = scmp.ne.s32.totalorder %s101, %s115
      %p117 = scmp.eq.s32.totalorder %s28, 0
      %p118 = por %p116, %p117
      %s120 = sadd.s32 %s119, 1
      %p123 = scmp.eq.s32.totalorder %s22, 1
      %p124 = scmp.ne.s32.totalorder %s119, %s121
      %p125 = scmp.eq.s32.totalorder %s22, 0
      %p126 = por %p124, %p125
      %p127 = scmp.ne.s32.totalorder %s119, %s121
      %p128 = scmp.eq.s32.totalorder %s27, 1
      %p129 = por %p127, %p128
      %p130 = scmp.ne.s32.totalorder %s121, %s122
      %p131 = scmp.eq.s32.totalorder %s27, 0
      %p132 = por %p130, %p131
      %p133 = scmp.ne.s32.totalorder %s121, %s122
      %p134 = scmp.eq.s32.totalorder %s28, 1
      %p135 = por %p133, %p134
      %p137 = scmp.ne.s32.totalorder %s122, %s136
      %p138 = scmp.eq.s32.totalorder %s28, 0
      %p139 = por %p137, %p138
      %s140 = ssub.s32 %s29, %s41
      %s141 = ssub.s32 %s30, %s37
      %s142 = sor.u32 %s140, %s141
      %p143 = scmp.eq.s32.totalorder %s142, 0
      %s145 = sadd.s32 %s144, 1
      %s146 = scalar_select %p143, %s144, %s145
      %p149 = pneg %p143
      %p150 = scmp.eq.s32.totalorder %s22, 1
      %p151 = por %p149, %p150
      %p152 = scmp.ne.s32.totalorder %s144, %s147
      %p153 = scmp.eq.s32.totalorder %s22, 0
      %p154 = por %p152, %p153
      %p155 = scmp.ne.s32.totalorder %s144, %s147
      %p156 = scmp.eq.s32.totalorder %s27, 1
      %p157 = por %p155, %p156
      %p158 = scmp.ne.s32.totalorder %s147, %s148
      %p159 = scmp.eq.s32.totalorder %s27, 0
      %p160 = por %p158, %p159
      %p161 = scmp.ne.s32.totalorder %s147, %s148
      %p162 = scmp.eq.s32.totalorder %s28, 1
      %p163 = por %p161, %p162
      %p165 = scmp.ne.s32.totalorder %s148, %s164
      %p166 = scmp.eq.s32.totalorder %s28, 0
      %p167 = por %p165, %p166
      %s168 = ssub.s32 %s29, %s41
      %s169 = ssub.s32 %s30, %s37
      %s170 = sor.u32 %s168, %s169
      %p171 = scmp.eq.s32.totalorder %s170, 0
      %s173 = sadd.s32 %s172, 1
      %s174 = scalar_select %p171, %s172, %s173
      %p177 = pneg %p171
      %p178 = scmp.eq.s32.totalorder %s22, 1
      %p179 = por %p177, %p178
      %p180 = scmp.ne.s32.totalorder %s172, %s175
      %p181 = scmp.eq.s32.totalorder %s22, 0
      %p182 = por %p180, %p181
      %p183 = scmp.ne.s32.totalorder %s172, %s175
      %p184 = scmp.eq.s32.totalorder %s27, 1
      %p185 = por %p183, %p184
      %p186 = scmp.ne.s32.totalorder %s175, %s176
      %p187 = scmp.eq.s32.totalorder %s27, 0
      %p188 = por %p186, %p187
      %p189 = scmp.ne.s32.totalorder %s175, %s176
      %p190 = scmp.eq.s32.totalorder %s28, 1
      %p191 = por %p189, %p190
      %p193 = scmp.ne.s32.totalorder %s176, %s192
      %p194 = scmp.eq.s32.totalorder %s28, 0
      %p195 = por %p193, %p194
      %p196 = scmp.le.s32.totalorder 1, %s22
      %p197 = scmp.lt.s32.totalorder %s22, 3
      %p198 = pnand %p196, %p197
      %p199 = pneg %p198
      // Predicated region
      $region9: #{awq_observer_forward.1} parent=5 // pred_check
        _
      $region10: #{awq_observer_forward.1} parent=5 // pred_check_branch
        %201 = sbr.rel (%p198) target = $region12
      $region11: #{awq_observer_forward.1} parent=5 // pred_region
        %s202 = ssub.s32 %s22, 1
        // Predicated region
        $region13: #{awq_observer_forward.1} parent=11 // pred_check
          %p203 = pneg %p111
        $region14: #{awq_observer_forward.1} parent=11 // pred_check_branch
          %205 = sbr.rel (%p203) target = $region16
        $region15: #{awq_observer_forward.1} parent=11 // pred_region
          %s207 = ssub.s32 2048, 2048
          %208 = vsyncadd [#allocation6], %s207
          %s209 = sshll.u32 [#allocation5], 4
          %s210 = int_to_ptr.vmem [resolvable:$true] %s209
          %215 = dma.hbm_to_vmem [thread:$0]  %s2, 2048, %s210, [#allocation6], 128, 128, 8
        $region16: #{awq_observer_forward.1} parent=11 // pred_fallthru
          _
        // Predicated region
        $region17: #{awq_observer_forward.1} parent=11 // pred_check
          %p216 = pneg %p132
        $region18: #{awq_observer_forward.1} parent=11 // pred_check_branch
          %218 = sbr.rel (%p216) target = $region20
        $region19: #{awq_observer_forward.1} parent=11 // pred_region
          %s220 = ssub.s32 16, 16
          %221 = vsyncadd [#allocation6], %s220
          %s223 = sshll.u32 [#allocation7], 4
          %s224 = int_to_ptr.vmem [resolvable:$true] %s223
          %226 = dma.hbm_to_vmem [thread:$0]  %s3, 16, %s224, [#allocation6]
        $region20: #{awq_observer_forward.1} parent=11 // pred_fallthru
          _
      $region12: #{awq_observer_forward.1} parent=5 // pred_fallthru
        _
      %p227 = scmp.lt.s32.totalorder %s22, 2
      // Predicated region
      $region21: #{awq_observer_forward.1} parent=5 // pred_check
        %p228 = pneg %p227
      $region22: #{awq_observer_forward.1} parent=5 // pred_check_branch
        %230 = sbr.rel (%p228) target = $region24
      $region23: #{awq_observer_forward.1} parent=5 // pred_region
        // Predicated region
        $region25: #{awq_observer_forward.1} parent=23 // pred_check
          %p231 = pneg %p56
        $region26: #{awq_observer_forward.1} parent=23 // pred_check_branch
          %233 = sbr.rel (%p231) target = $region28
        $region27: #{awq_observer_forward.1} parent=23 // pred_region
          %s234 = smul.u32 32, %s30
          %p235 = scmp.lt.s32.totalorder %s29, 1
          %s236 = scalar_select %p235, %s29, 1
          %p237 = scmp.lt.s32.totalorder %s234, 31
          %s238 = scalar_select %p237, %s234, 31
          %s239 = smul.addr %s236, 32
          %s240 = sadd.s32 %s238, %s239
          %s241 = smul.addr %s240, 8
          %s242 = scalar_lea.vmem %s0, %s241
          %s243 = smul.u32 32, %s30
        $region28: #{awq_observer_forward.1} parent=23 // pred_fallthru
          _
        // Predicated region
        $region29: #{awq_observer_forward.1} parent=23 // pred_check
          %p244 = pneg %p84
        $region30: #{awq_observer_forward.1} parent=23 // pred_check_branch
          %246 = sbr.rel (%p244) target = $region32
        $region31: #{awq_observer_forward.1} parent=23 // pred_region
          %s247 = sand.u32 %s74, 1
          %s248 = scalar_lea.sflag [#allocation3], %s247
          %s249 = sand.u32 %s74, 1
          %s250 = smul.addr %s249, 256
          %s251 = scalar_lea.vmem [#allocation2], %s250
          %s252 = smul.u32 32, %s30
          %s254 = ssub.s32 4096, 4096
          %255 = vsyncadd %s248, %s254
          %s256 = smul.addr %s29, 32
          %s257 = sadd.s32 %s252, %s256
          %s258 = smul.addr %s257, 128
          %s259 = scalar_lea.hbm %s1, %s258
          %s260 = sshll.u32 %s251, 4
          %s261 = int_to_ptr.vmem [resolvable:$true] %s260
          %266 = dma.hbm_to_vmem [thread:$0]  %s259, 4096, %s261, %s248, 128, 128, 8
        $region32: #{awq_observer_forward.1} parent=23 // pred_fallthru
          _
      $region24: #{awq_observer_forward.1} parent=5 // pred_fallthru
        _
      %p267 = scmp.le.s32.totalorder 1, %s22
      %p268 = scmp.lt.s32.totalorder %s22, 3
      %p269 = pnand %p267, %p268
      %p270 = pneg %p269
      // Predicated region
      $region33: #{awq_observer_forward.1} parent=5 // pred_check
        _
      $region34: #{awq_observer_forward.1} parent=5 // pred_check_branch
        %272 = sbr.rel (%p269) target = $region36
      $region35: #{awq_observer_forward.1} parent=5 // pred_region
        %s273 = ssub.s32 %s22, 1
        %s274 = sand.u32 %s77, 1
        %s275 = scalar_lea.sflag [#allocation3], %s274
        %s276 = sand.u32 %s77, 1
        %s277 = smul.addr %s276, 256
        %s278 = scalar_lea.vmem [#allocation2], %s277
        // Predicated region
        $region37: #{awq_observer_forward.1} parent=35 // pred_check
          %p279 = pneg %p90
        $region38: #{awq_observer_forward.1} parent=35 // pred_check_branch
          %281 = sbr.rel (%p279) target = $region40
        $region39: #{awq_observer_forward.1} parent=35 // pred_region
          %282 = dma.done %s275, 4096
        $region40: #{awq_observer_forward.1} parent=35 // pred_fallthru
          _
        // Predicated region
        $region41: #{awq_observer_forward.1} parent=35 // pred_check
          %p283 = pneg %p111
        $region42: #{awq_observer_forward.1} parent=35 // pred_check_branch
          %285 = sbr.rel (%p283) target = $region44
        $region43: #{awq_observer_forward.1} parent=35 // pred_region
          %286 = dma.done [#allocation6], 2048
        $region44: #{awq_observer_forward.1} parent=35 // pred_fallthru
          _
        // Predicated region
        $region45: #{awq_observer_forward.1} parent=35 // pred_check
          %p287 = pneg %p132
        $region46: #{awq_observer_forward.1} parent=35 // pred_check_branch
          %289 = sbr.rel (%p287) target = $region48
        $region47: #{awq_observer_forward.1} parent=35 // pred_region
          %290 = dma.done [#allocation6], 16
        $region48: #{awq_observer_forward.1} parent=35 // pred_fallthru
          _
        %s291 = smul.u32 32, %s32
        %p292 = scmp.lt.s32.totalorder %s31, 1
        %s293 = scalar_select %p292, %s31, 1
        %p294 = scmp.lt.s32.totalorder %s291, 31
        %s295 = scalar_select %p294, %s291, 31
        %s296 = smul.addr %s293, 32
        %s297 = sadd.s32 %s295, %s296
        %s298 = smul.addr %s297, 8
        %s299 = scalar_lea.vmem %s0, %s298
        %p300 = pneg %p62
        %p301 = pneg %p59
        %s302 = sand.u32 %s77, 1
        %s303 = scalar_lea.sflag [#allocation3], %s302
        %s304 = sand.u32 %s77, 1
        %s305 = smul.addr %s304, 256
        %s306 = scalar_lea.vmem [#allocation2], %s305
        %p307 = pneg %p90
        %p308 = pneg %p87
        %p309 = pneg %p111
        %p310 = pneg %p108
        %p311 = pneg %p132
        %p312 = pneg %p129
        %p313 = pneg %p160
        %p314 = pneg %p157
        %s315 = sand.u32 %s147, 1
        %s316 = scalar_lea.sflag [#allocation4], %s315
        %s317 = sand.u32 %s147, 1
        %s318 = smul.addr %s317, 256
        %s319 = scalar_lea.vmem [#allocation8], %s318
        %p320 = pneg %p188
        %p321 = pneg %p185
        %s322 = sand.u32 %s175, 1
        %s323 = scalar_lea.sflag [#allocation10], %s322
        %s324 = sand.u32 %s175, 1
        %s325 = smul.addr %s324, 8
        %s326 = scalar_lea.vmem [#allocation9], %s325
        %s327 = smul.u32 32, %s32
        %p328 = scmp.lt.s32.totalorder %s31, 1
        %s329 = scalar_select %p328, %s31, 1
        %p330 = scmp.lt.s32.totalorder %s327, 31
        %s331 = scalar_select %p330, %s327, 31
        %s332 = smul.addr %s329, 32
        %s333 = sadd.s32 %s331, %s332
        %s334 = smul.addr %s333, 8
        %s335 = scalar_lea.vmem %s0, %s334
        %s336 = smul.u32 32, %s32
        %s337 = smul.u32 32, %s32
        %s338 = smul.u32 32, %s32
        %v339 = vld [vmem:[%s278] sm:$0xff]
        %v340 = vld [vmem:[%s278 + $0x8] sm:$0xff]
        %v341 = vld [vmem:[%s278 + $0x10] sm:$0xff]
        %v342 = vld [vmem:[%s278 + $0x18] sm:$0xff]
        %v343 = vld [vmem:[%s278 + $0x20] sm:$0xff]
        %v344 = vld [vmem:[%s278 + $0x28] sm:$0xff]
        %v345 = vld [vmem:[%s278 + $0x30] sm:$0xff]
        %v346 = vld [vmem:[%s278 + $0x38] sm:$0xff]
        %v347 = vld [vmem:[%s278 + $0x40] sm:$0xff]
        %v348 = vld [vmem:[%s278 + $0x48] sm:$0xff]
        %v349 = vld [vmem:[%s278 + $0x50] sm:$0xff]
        %v350 = vld [vmem:[%s278 + $0x58] sm:$0xff]
        %v351 = vld [vmem:[%s278 + $0x60] sm:$0xff]
        %v352 = vld [vmem:[%s278 + $0x68] sm:$0xff]
        %v353 = vld [vmem:[%s278 + $0x70] sm:$0xff]
        %v354 = vld [vmem:[%s278 + $0x78] sm:$0xff]
        %v355 = vld [vmem:[%s278 + $0x80] sm:$0xff]
        %v356 = vld [vmem:[%s278 + $0x88] sm:$0xff]
        %v357 = vld [vmem:[%s278 + $0x90] sm:$0xff]
        %v358 = vld [vmem:[%s278 + $0x98] sm:$0xff]
        %v359 = vld [vmem:[%s278 + $0xa0] sm:$0xff]
        %v360 = vld [vmem:[%s278 + $0xa8] sm:$0xff]
        %v361 = vld [vmem:[%s278 + $0xb0] sm:$0xff]
        %v362 = vld [vmem:[%s278 + $0xb8] sm:$0xff]
        %v363 = vld [vmem:[%s278 + $0xc0] sm:$0xff]
        %v364 = vld [vmem:[%s278 + $0xc8] sm:$0xff]
        %v365 = vld [vmem:[%s278 + $0xd0] sm:$0xff]
        %v366 = vld [vmem:[%s278 + $0xd8] sm:$0xff]
        %v367 = vld [vmem:[%s278 + $0xe0] sm:$0xff]
        %v368 = vld [vmem:[%s278 + $0xe8] sm:$0xff]
        %v369 = vld [vmem:[%s278 + $0xf0] sm:$0xff]
        %v370 = vld [vmem:[%s278 + $0xf8] sm:$0xff]
        %v371 = vand.u32 2147483647, %v339
        %v372 = vand.u32 2147483647, %v340
        %v373 = vand.u32 2147483647, %v341
        %v374 = vand.u32 2147483647, %v342
        %v375 = vand.u32 2147483647, %v343
        %v376 = vand.u32 2147483647, %v344
        %v377 = vand.u32 2147483647, %v345
        %v378 = vand.u32 2147483647, %v346
        %v379 = vand.u32 2147483647, %v347
        %v380 = vand.u32 2147483647, %v348
        %v381 = vand.u32 2147483647, %v349
        %v382 = vand.u32 2147483647, %v350
        %v383 = vand.u32 2147483647, %v351
        %v384 = vand.u32 2147483647, %v352
        %v385 = vand.u32 2147483647, %v353
        %v386 = vand.u32 2147483647, %v354
        %v387 = vand.u32 2147483647, %v355
        %v388 = vand.u32 2147483647, %v356
        %v389 = vand.u32 2147483647, %v357
        %v390 = vand.u32 2147483647, %v358
        %v391 = vand.u32 2147483647, %v359
        %v392 = vand.u32 2147483647, %v360
        %v393 = vand.u32 2147483647, %v361
        %v394 = vand.u32 2147483647, %v362
        %v395 = vand.u32 2147483647, %v363
        %v396 = vand.u32 2147483647, %v364
        %v397 = vand.u32 2147483647, %v365
        %v398 = vand.u32 2147483647, %v366
        %v399 = vand.u32 2147483647, %v367
        %v400 = vand.u32 2147483647, %v368
        %v401 = vand.u32 2147483647, %v369
        %v402 = vand.u32 2147483647, %v370
        %vm403 = vcmask 31744
        %v404 = vsel %vm403, %v371, -inf
        %v405 = vsel %vm403, %v372, -inf
        %v406 = vsel %vm403, %v373, -inf
        %v407 = vsel %vm403, %v374, -inf
        %v408 = vsel %vm403, %v375, -inf
        %v409 = vmax.f32 %v404, %v408
        %v410 = vsel %vm403, %v376, -inf
        %v411 = vmax.f32 %v405, %v410
        %v412 = vsel %vm403, %v377, -inf
        %v413 = vmax.f32 %v406, %v412
        %v414 = vsel %vm403, %v378, -inf
        %v415 = vmax.f32 %v407, %v414
        %v416 = vsel %vm403, %v379, -inf
        %v417 = vmax.f32 %v409, %v416
        %v418 = vsel %vm403, %v380, -inf
        %v419 = vmax.f32 %v411, %v418
        %v420 = vsel %vm403, %v381, -inf
        %v421 = vmax.f32 %v413, %v420
        %v422 = vsel %vm403, %v382, -inf
        %v423 = vmax.f32 %v415, %v422
        %v424 = vsel %vm403, %v383, -inf
        %v425 = vmax.f32 %v417, %v424
        %v426 = vsel %vm403, %v384, -inf
        %v427 = vmax.f32 %v419, %v426
        %v428 = vsel %vm403, %v385, -inf
        %v429 = vmax.f32 %v421, %v428
        %v430 = vsel %vm403, %v386, -inf
        %v431 = vmax.f32 %v423, %v430
        %v432 = vsel %vm403, %v387, -inf
        %v433 = vmax.f32 %v425, %v432
        %v434 = vsel %vm403, %v388, -inf
        %v435 = vmax.f32 %v427, %v434
        %v436 = vsel %vm403, %v389, -inf
        %v437 = vmax.f32 %v429, %v436
        %v438 = vsel %vm403, %v390, -inf
        %v439 = vmax.f32 %v431, %v438
        %v440 = vsel %vm403, %v391, -inf
        %v441 = vmax.f32 %v433, %v440
        %v442 = vsel %vm403, %v392, -inf
        %v443 = vmax.f32 %v435, %v442
        %v444 = vsel %vm403, %v393, -inf
        %v445 = vmax.f32 %v437, %v444
        %v446 = vsel %vm403, %v394, -inf
        %v447 = vmax.f32 %v439, %v446
        %v448 = vsel %vm403, %v395, -inf
        %v449 = vmax.f32 %v441, %v448
        %v450 = vsel %vm403, %v396, -inf
        %v451 = vmax.f32 %v443, %v450
        %v452 = vsel %vm403, %v397, -inf
        %v453 = vmax.f32 %v445, %v452
        %v454 = vsel %vm403, %v398, -inf
        %v455 = vmax.f32 %v447, %v454
        %v456 = vsel %vm403, %v399, -inf
        %v457 = vmax.f32 %v449, %v456
        %v458 = vsel %vm403, %v400, -inf
        %v459 = vmax.f32 %v451, %v458
        %v460 = vsel %vm403, %v401, -inf
        %v461 = vmax.f32 %v453, %v460
        %v462 = vsel %vm403, %v402, -inf
        %v463 = vmax.f32 %v455, %v462
        %v464 = vmax.f32 %v457, %v459
        %v465 = vmax.f32 %v461, %v463
        %v466 = vmax.f32 %v464, %v465
        %v467 = vrot.slane %v466, 4
        %v468 = vmax.f32 %v466, %v467
        %v469 = vrot.slane %v468, 2
        %v470 = vmax.f32 %v468, %v469
        %v471 = vrot.slane %v470, 1
        %v472 = vmax.f32 %v470, %v471
        %473 = vst.msk [vmem:[%s326] sm:$0xff] %vm403, %v472
        %v474 = vld [vmem:[%s335] sm:$0xff]
        %v475 = vld [vmem:[%s335 + $0x8] sm:$0xff]
        %v476 = vld [vmem:[%s335 + $0x10] sm:$0xff]
        %v477 = vld [vmem:[%s335 + $0x18] sm:$0xff]
        %v478 = vld [vmem:[%s335 + $0x20] sm:$0xff]
        %v479 = vld [vmem:[%s335 + $0x28] sm:$0xff]
        %v480 = vld [vmem:[%s335 + $0x30] sm:$0xff]
        %v481 = vld [vmem:[%s335 + $0x38] sm:$0xff]
        %v482 = vld [vmem:[%s335 + $0x40] sm:$0xff]
        %v483 = vld [vmem:[%s335 + $0x48] sm:$0xff]
        %v484 = vld [vmem:[%s335 + $0x50] sm:$0xff]
        %v485 = vld [vmem:[%s335 + $0x58] sm:$0xff]
        %v486 = vld [vmem:[%s335 + $0x60] sm:$0xff]
        %v487 = vld [vmem:[%s335 + $0x68] sm:$0xff]
        %v488 = vld [vmem:[%s335 + $0x70] sm:$0xff]
        %v489 = vld [vmem:[%s335 + $0x78] sm:$0xff]
        %v490 = vld [vmem:[%s335 + $0x80] sm:$0xff]
        %v491 = vld [vmem:[%s335 + $0x88] sm:$0xff]
        %v492 = vld [vmem:[%s335 + $0x90] sm:$0xff]
        %v493 = vld [vmem:[%s335 + $0x98] sm:$0xff]
        %v494 = vld [vmem:[%s335 + $0xa0] sm:$0xff]
        %v495 = vld [vmem:[%s335 + $0xa8] sm:$0xff]
        %v496 = vld [vmem:[%s335 + $0xb0] sm:$0xff]
        %v497 = vld [vmem:[%s335 + $0xb8] sm:$0xff]
        %v498 = vld [vmem:[%s335 + $0xc0] sm:$0xff]
        %v499 = vld [vmem:[%s335 + $0xc8] sm:$0xff]
        %v500 = vld [vmem:[%s335 + $0xd0] sm:$0xff]
        %v501 = vld [vmem:[%s335 + $0xd8] sm:$0xff]
        %v502 = vld [vmem:[%s335 + $0xe0] sm:$0xff]
        %v503 = vld [vmem:[%s335 + $0xe8] sm:$0xff]
        %v504 = vld [vmem:[%s335 + $0xf0] sm:$0xff]
        %v505 = vld [vmem:[%s335 + $0xf8] sm:$0xff]
        %v506 = vld [vmem:[#allocation5] sm:$0xff]
        %v507 = vld [vmem:[#allocation5 + $0x8] sm:$0xff]
        %v508 = vld [vmem:[#allocation5 + $0x10] sm:$0xff]
        %v509 = vld [vmem:[#allocation5 + $0x18] sm:$0xff]
        %v510 = vld [vmem:[#allocation5 + $0x20] sm:$0xff]
        %v511 = vld [vmem:[#allocation5 + $0x28] sm:$0xff]
        %v512 = vld [vmem:[#allocation5 + $0x30] sm:$0xff]
        %v513 = vld [vmem:[#allocation5 + $0x38] sm:$0xff]
        %v514 = vld [vmem:[#allocation5 + $0x40] sm:$0xff]
        %v515 = vld [vmem:[#allocation5 + $0x48] sm:$0xff]
        %v516 = vld [vmem:[#allocation5 + $0x50] sm:$0xff]
        %v517 = vld [vmem:[#allocation5 + $0x58] sm:$0xff]
        %v518 = vld [vmem:[#allocation5 + $0x60] sm:$0xff]
        %v519 = vld [vmem:[#allocation5 + $0x68] sm:$0xff]
        %v520 = vld [vmem:[#allocation5 + $0x70] sm:$0xff]
        %v521 = vld [vmem:[#allocation5 + $0x78] sm:$0xff]
        %v522 = vld [vmem:[#allocation7] sm:$0x1]
        %v524 = vlaneseq
        %v525 = vshrl.u32 %v524, 7
        %v526 = vsub.s32 0, %v525
        %v527 = vrot.slane %v522, %v526
        %529 = vmatprep.subr.mxu0 0.0
        %530 = vmatpush1.msra.mxu0 %v506
        %531 = vmatprep.subr.mxu0 0.0
        %532 = vmatpush1.msra.mxu0 %v507
        %533 = vmatprep.subr.mxu0 0.0
        %534 = vmatpush1.msra.mxu0 %v508
        %535 = vmatprep.subr.mxu0 0.0
        %536 = vmatpush1.msra.mxu0 %v509
        %537 = vmatprep.subr.mxu0 0.0
        %538 = vmatpush1.msra.mxu0 %v510
        %539 = vmatprep.subr.mxu0 0.0
        %540 = vmatpush1.msra.mxu0 %v511
        %541 = vmatprep.subr.mxu0 0.0
        %542 = vmatpush1.msra.mxu0 %v512
        %543 = vmatprep.subr.mxu0 0.0
        %544 = vmatpush1.msra.mxu0 %v513
        %545 = vmatprep.subr.mxu0 0.0
        %546 = vmatpush1.msra.mxu0 %v514
        %547 = vmatprep.subr.mxu0 0.0
        %548 = vmatpush1.msra.mxu0 %v515
        %549 = vmatprep.subr.mxu0 0.0
        %550 = vmatpush1.msra.mxu0 %v516
        %551 = vmatprep.subr.mxu0 0.0
        %552 = vmatpush1.msra.mxu0 %v517
        %553 = vmatprep.subr.mxu0 0.0
        %554 = vmatpush1.msra.mxu0 %v518
        %555 = vmatprep.subr.mxu0 0.0
        %556 = vmatpush1.msra.mxu0 %v519
        %557 = vmatprep.subr.mxu0 0.0
        %558 = vmatpush1.msra.mxu0 %v520
        %559 = vmatprep.subr.mxu0 0.0
        %560 = vmatpush1.msra.mxu0 %v521
        %561 = vmatprep.subr.mxu0 0.0
        %562 = vmatpush1.msra.mxu0 0.0
        %563 = vmatprep.subr.mxu0 0.0
        %564 = vmatpush1.msra.mxu0 0.0
        %565 = vmatprep.subr.mxu0 0.0
        %566 = vmatpush1.msra.mxu0 0.0
        %567 = vmatprep.subr.mxu0 0.0
        %568 = vmatpush1.msra.mxu0 0.0
        %569 = vmatprep.subr.mxu0 0.0
        %570 = vmatpush1.msra.mxu0 0.0
        %571 = vmatprep.subr.mxu0 0.0
        %572 = vmatpush1.msra.mxu0 0.0
        %573 = vmatprep.subr.mxu0 0.0
        %574 = vmatpush1.msra.mxu0 0.0
        %575 = vmatprep.subr.mxu0 0.0
        %576 = vmatpush1.msra.mxu0 0.0
        %577 = vmatprep.subr.mxu0 0.0
        %578 = vmatpush1.msra.mxu0 0.0
        %579 = vmatprep.subr.mxu0 0.0
        %580 = vmatpush1.msra.mxu0 0.0
        %581 = vmatprep.subr.mxu0 0.0
        %582 = vmatpush1.msra.mxu0 0.0
        %583 = vmatprep.subr.mxu0 0.0
        %584 = vmatpush1.msra.mxu0 0.0
        %585 = vmatprep.subr.mxu0 0.0
        %586 = vmatpush1.msra.mxu0 0.0
        %587 = vmatprep.subr.mxu0 0.0
        %588 = vmatpush1.msra.mxu0 0.0
        %589 = vmatprep.subr.mxu0 0.0
        %590 = vmatpush1.msra.mxu0 0.0
        %591 = vmatprep.subr.mxu0 0.0
        %592 = vmatpush1.msra.mxu0 0.0
        %593 = vmatprep.mubr.f32.mxu0 0.0
        %594 = vmatmul.mubr.f32.gmra.mrb[0].mxu0 %v474
        %v595 = vpop.f32.mrb[0].mxu0
        %v596 = vadd.f32 %v527, %v595
        %v597 = vpop.f32.mrb[0].mxu0
        %598 = vmatprep.mubr.f32.mxu0 0.0
        %599 = vmatmul.mubr.f32.gmra.mrb[0].mxu0 %v475
        %v600 = vpop.f32.mrb[0].mxu0
        %v601 = vadd.f32 %v527, %v600
        %v602 = vpop.f32.mrb[0].mxu0
        %603 = vmatprep.mubr.f32.mxu0 0.0
        %604 = vmatmul.mubr.f32.gmra.mrb[0].mxu0 %v476
        %v605 = vpop.f32.mrb[0].mxu0
        %v606 = vadd.f32 %v527, %v605
        %v607 = vpop.f32.mrb[0].mxu0
        %608 = vmatprep.mubr.f32.mxu0 0.0
        %609 = vmatmul.mubr.f32.gmra.mrb[0].mxu0 %v477
        %v610 = vpop.f32.mrb[0].mxu0
        %v611 = vadd.f32 %v527, %v610
        %v612 = vpop.f32.mrb[0].mxu0
        %613 = vmatprep.mubr.f32.mxu0 0.0
        %614 = vmatmul.mubr.f32.gmra.mrb[0].mxu0 %v478
        %v615 = vpop.f32.mrb[0].mxu0
        %v616 = vadd.f32 %v527, %v615
        %v617 = vpop.f32.mrb[0].mxu0
        %618 = vmatprep.mubr.f32.mxu0 0.0
        %619 = vmatmul.mubr.f32.gmra.mrb[0].mxu0 %v479
        %v620 = vpop.f32.mrb[0].mxu0
        %v621 = vadd.f32 %v527, %v620
        %v622 = vpop.f32.mrb[0].mxu0
        %623 = vmatprep.mubr.f32.mxu0 0.0
        %624 = vmatmul.mubr.f32.gmra.mrb[0].mxu0 %v480
        %v625 = vpop.f32.mrb[0].mxu0
        %v626 = vadd.f32 %v527, %v625
        %v627 = vpop.f32.mrb[0].mxu0
        %628 = vmatprep.mubr.f32.mxu0 0.0
        %629 = vmatmul.mubr.f32.gmra.mrb[0].mxu0 %v481
        %v630 = vpop.f32.mrb[0].mxu0
        %v631 = vadd.f32 %v527, %v630
        %v632 = vpop.f32.mrb[0].mxu0
        %633 = vmatprep.mubr.f32.mxu0 0.0
        %634 = vmatmul.mubr.f32.gmra.mrb[0].mxu0 %v482
        %v635 = vpop.f32.mrb[0].mxu0
        %v636 = vadd.f32 %v527, %v635
        %v637 = vpop.f32.mrb[0].mxu0
        %638 = vmatprep.mubr.f32.mxu0 0.0
        %639 = vmatmul.mubr.f32.gmra.mrb[0].mxu0 %v483
        %v640 = vpop.f32.mrb[0].mxu0
        %v641 = vadd.f32 %v527, %v640
        %v642 = vpop.f32.mrb[0].mxu0
        %643 = vmatprep.mubr.f32.mxu0 0.0
        %644 = vmatmul.mubr.f32.gmra.mrb[0].mxu0 %v484
        %v645 = vpop.f32.mrb[0].mxu0
        %v646 = vadd.f32 %v527, %v645
        %v647 = vpop.f32.mrb[0].mxu0
        %648 = vmatprep.mubr.f32.mxu0 0.0
        %649 = vmatmul.mubr.f32.gmra.mrb[0].mxu0 %v485
        %v650 = vpop.f32.mrb[0].mxu0
        %v651 = vadd.f32 %v527, %v650
        %v652 = vpop.f32.mrb[0].mxu0
        %653 = vmatprep.mubr.f32.mxu0 0.0
        %654 = vmatmul.mubr.f32.gmra.mrb[0].mxu0 %v486
        %v655 = vpop.f32.mrb[0].mxu0
        %v656 = vadd.f32 %v527, %v655
        %v657 = vpop.f32.mrb[0].mxu0
        %658 = vmatprep.mubr.f32.mxu0 0.0
        %659 = vmatmul.mubr.f32.gmra.mrb[0].mxu0 %v487
        %v660 = vpop.f32.mrb[0].mxu0
        %v661 = vadd.f32 %v527, %v660
        %v662 = vpop.f32.mrb[0].mxu0
        %663 = vmatprep.mubr.f32.mxu0 0.0
        %664 = vmatmul.mubr.f32.gmra.mrb[0].mxu0 %v488
        %v665 = vpop.f32.mrb[0].mxu0
        %v666 = vadd.f32 %v527, %v665
        %v667 = vpop.f32.mrb[0].mxu0
        %668 = vmatprep.mubr.f32.mxu0 0.0
        %669 = vmatmul.mubr.f32.gmra.mrb[0].mxu0 %v489
        %v670 = vpop.f32.mrb[0].mxu0
        %v671 = vadd.f32 %v527, %v670
        %v672 = vpop.f32.mrb[0].mxu0
        %673 = vmatprep.mubr.f32.mxu0 0.0
        %674 = vmatmul.mubr.f32.gmra.mrb[0].mxu0 %v490
        %v675 = vpop.f32.mrb[0].mxu0
        %v676 = vadd.f32 %v527, %v675
        %v677 = vpop.f32.mrb[0].mxu0
        %678 = vmatprep.mubr.f32.mxu0 0.0
        %679 = vmatmul.mubr.f32.gmra.mrb[0].mxu0 %v491
        %v680 = vpop.f32.mrb[0].mxu0
        %v681 = vadd.f32 %v527, %v680
        %v682 = vpop.f32.mrb[0].mxu0
        %683 = vmatprep.mubr.f32.mxu0 0.0
        %684 = vmatmul.mubr.f32.gmra.mrb[0].mxu0 %v492
        %v685 = vpop.f32.mrb[0].mxu0
        %v686 = vadd.f32 %v527, %v685
        %v687 = vpop.f32.mrb[0].mxu0
        %688 = vmatprep.mubr.f32.mxu0 0.0
        %689 = vmatmul.mubr.f32.gmra.mrb[0].mxu0 %v493
        %v690 = vpop.f32.mrb[0].mxu0
        %v691 = vadd.f32 %v527, %v690
        %v692 = vpop.f32.mrb[0].mxu0
        %693 = vmatprep.mubr.f32.mxu0 0.0
        %694 = vmatmul.mubr.f32.gmra.mrb[0].mxu0 %v494
        %v695 = vpop.f32.mrb[0].mxu0
        %v696 = vadd.f32 %v527, %v695
        %v697 = vpop.f32.mrb[0].mxu0
        %698 = vmatprep.mubr.f32.mxu0 0.0
        %699 = vmatmul.mubr.f32.gmra.mrb[0].mxu0 %v495
        %v700 = vpop.f32.mrb[0].mxu0
        %v701 = vadd.f32 %v527, %v700
        %v702 = vpop.f32.mrb[0].mxu0
        %703 = vmatprep.mubr.f32.mxu0 0.0
        %704 = vmatmul.mubr.f32.gmra.mrb[0].mxu0 %v496
        %v705 = vpop.f32.mrb[0].mxu0
        %v706 = vadd.f32 %v527, %v705
        %v707 = vpop.f32.mrb[0].mxu0
        %708 = vmatprep.mubr.f32.mxu0 0.0
        %709 = vmatmul.mubr.f32.gmra.mrb[0].mxu0 %v497
        %v710 = vpop.f32.mrb[0].mxu0
        %v711 = vadd.f32 %v527, %v710
        %v712 = vpop.f32.mrb[0].mxu0
        %713 = vmatprep.mubr.f32.mxu0 0.0
        %714 = vmatmul.mubr.f32.gmra.mrb[0].mxu0 %v498
        %v715 = vpop.f32.mrb[0].mxu0
        %v716 = vadd.f32 %v527, %v715
        %v717 = vpop.f32.mrb[0].mxu0
        %718 = vmatprep.mubr.f32.mxu0 0.0
        %719 = vmatmul.mubr.f32.gmra.mrb[0].mxu0 %v499
        %v720 = vpop.f32.mrb[0].mxu0
        %v721 = vadd.f32 %v527, %v720
        %v722 = vpop.f32.mrb[0].mxu0
        %723 = vmatprep.mubr.f32.mxu0 0.0
        %724 = vmatmul.mubr.f32.gmra.mrb[0].mxu0 %v500
        %v725 = vpop.f32.mrb[0].mxu0
        %v726 = vadd.f32 %v527, %v725
        %v727 = vpop.f32.mrb[0].mxu0
        %728 = vmatprep.mubr.f32.mxu0 0.0
        %729 = vmatmul.mubr.f32.gmra.mrb[0].mxu0 %v501
        %v730 = vpop.f32.mrb[0].mxu0
        %v731 = vadd.f32 %v527, %v730
        %v732 = vpop.f32.mrb[0].mxu0
        %733 = vmatprep.mubr.f32.mxu0 0.0
        %734 = vmatmul.mubr.f32.gmra.mrb[0].mxu0 %v502
        %v735 = vpop.f32.mrb[0].mxu0
        %v736 = vadd.f32 %v527, %v735
        %v737 = vpop.f32.mrb[0].mxu0
        %738 = vmatprep.mubr.f32.mxu0 0.0
        %739 = vmatmul.mubr.f32.gmra.mrb[0].mxu0 %v503
        %v740 = vpop.f32.mrb[0].mxu0
        %v741 = vadd.f32 %v527, %v740
        %v742 = vpop.f32.mrb[0].mxu0
        %743 = vmatprep.mubr.f32.mxu0 0.0
        %744 = vmatmul.mubr.f32.gmra.mrb[0].mxu0 %v504
        %v745 = vpop.f32.mrb[0].mxu0
        %v746 = vadd.f32 %v527, %v745
        %v747 = vpop.f32.mrb[0].mxu0
        %748 = vmatprep.mubr.f32.mxu0 0.0
        %749 = vmatmul.mubr.f32.gmra.mrb[0].mxu0 %v505
        %v750 = vpop.f32.mrb[0].mxu0
        %v751 = vadd.f32 %v527, %v750
        %v752 = vpop.f32.mrb[0].mxu0
        %753 = vdwg.mxu0
        %754 = vst [vmem:[%s319] sm:$0xff] %v596
        %755 = vst [vmem:[%s319 + $0x8] sm:$0xff] %v601
        %756 = vst [vmem:[%s319 + $0x10] sm:$0xff] %v606
        %757 = vst [vmem:[%s319 + $0x18] sm:$0xff] %v611
        %758 = vst [vmem:[%s319 + $0x20] sm:$0xff] %v616
        %759 = vst [vmem:[%s319 + $0x28] sm:$0xff] %v621
        %760 = vst [vmem:[%s319 + $0x30] sm:$0xff] %v626
        %761 = vst [vmem:[%s319 + $0x38] sm:$0xff] %v631
        %762 = vst [vmem:[%s319 + $0x40] sm:$0xff] %v636
        %763 = vst [vmem:[%s319 + $0x48] sm:$0xff] %v641
        %764 = vst [vmem:[%s319 + $0x50] sm:$0xff] %v646
        %765 = vst [vmem:[%s319 + $0x58] sm:$0xff] %v651
        %766 = vst [vmem:[%s319 + $0x60] sm:$0xff] %v656
        %767 = vst [vmem:[%s319 + $0x68] sm:$0xff] %v661
        %768 = vst [vmem:[%s319 + $0x70] sm:$0xff] %v666
        %769 = vst [vmem:[%s319 + $0x78] sm:$0xff] %v671
        %770 = vst [vmem:[%s319 + $0x80] sm:$0xff] %v676
        %771 = vst [vmem:[%s319 + $0x88] sm:$0xff] %v681
        %772 = vst [vmem:[%s319 + $0x90] sm:$0xff] %v686
        %773 = vst [vmem:[%s319 + $0x98] sm:$0xff] %v691
        %774 = vst [vmem:[%s319 + $0xa0] sm:$0xff] %v696
        %775 = vst [vmem:[%s319 + $0xa8] sm:$0xff] %v701
        %776 = vst [vmem:[%s319 + $0xb0] sm:$0xff] %v706
        %777 = vst [vmem:[%s319 + $0xb8] sm:$0xff] %v711
        %778 = vst [vmem:[%s319 + $0xc0] sm:$0xff] %v716
        %779 = vst [vmem:[%s319 + $0xc8] sm:$0xff] %v721
        %780 = vst [vmem:[%s319 + $0xd0] sm:$0xff] %v726
        %781 = vst [vmem:[%s319 + $0xd8] sm:$0xff] %v731
        %782 = vst [vmem:[%s319 + $0xe0] sm:$0xff] %v736
        %783 = vst [vmem:[%s319 + $0xe8] sm:$0xff] %v741
        %784 = vst [vmem:[%s319 + $0xf0] sm:$0xff] %v746
        %785 = vst [vmem:[%s319 + $0xf8] sm:$0xff] %v751
        %s786 = sand.u32 %s147, 1
        %s787 = scalar_lea.sflag [#allocation4], %s786
        %s788 = sand.u32 %s147, 1
        %s789 = smul.addr %s788, 256
        %s790 = scalar_lea.vmem [#allocation8], %s789
        %s791 = sand.u32 %s175, 1
        %s792 = scalar_lea.sflag [#allocation10], %s791
        %s793 = sand.u32 %s175, 1
        %s794 = smul.addr %s793, 8
        %s795 = scalar_lea.vmem [#allocation9], %s794
        // Predicated region
        $region49: #{awq_observer_forward.1} parent=35 // pred_check
          %p796 = pneg %p157
        $region50: #{awq_observer_forward.1} parent=35 // pred_check_branch
          %798 = sbr.rel (%p796) target = $region52
        $region51: #{awq_observer_forward.1} parent=35 // pred_region
          %s799 = smul.u32 32, %s32
          %s801 = ssub.s32 4096, 4096
          %802 = vsyncadd %s787, %s801
          %s803 = smul.addr %s31, 32
          %s804 = sadd.s32 %s799, %s803
          %s805 = smul.addr %s804, 128
          %s806 = scalar_lea.hbm %s4, %s805
          %s807 = sshll.u32 %s790, 4
          %s808 = int_to_ptr.vmem [resolvable:$true] %s807
          %813 = dma.vmem_to_hbm [thread:$0]  %s808, 4096, %s806, %s787, 128, 128, 8
        $region52: #{awq_observer_forward.1} parent=35 // pred_fallthru
          _
        // Predicated region
        $region53: #{awq_observer_forward.1} parent=35 // pred_check
          %p814 = pneg %p185
        $region54: #{awq_observer_forward.1} parent=35 // pred_check_branch
          %816 = sbr.rel (%p814) target = $region56
        $region55: #{awq_observer_forward.1} parent=35 // pred_region
          %s818 = ssub.s32 128, 128
          %819 = vsyncadd %s792, %s818
          %s820 = sadd.s32 %s32, %s31
          %s821 = smul.addr %s820, 128
          %s822 = scalar_lea.hbm %s5, %s821
          %s824 = sshll.u32 %s795, 4
          %s825 = int_to_ptr.vmem [resolvable:$true] %s824
          %827 = dma.vmem_to_hbm [thread:$0]  %s825, 128, %s822, %s792
        $region56: #{awq_observer_forward.1} parent=35 // pred_fallthru
          _
      $region36: #{awq_observer_forward.1} parent=5 // pred_fallthru
        _
      %p828 = scmp.le.s32.totalorder 2, %s22
      // Predicated region
      $region57: #{awq_observer_forward.1} parent=5 // pred_check
        %p829 = pneg %p828
      $region58: #{awq_observer_forward.1} parent=5 // pred_check_branch
        %831 = sbr.rel (%p829) target = $region60
      $region59: #{awq_observer_forward.1} parent=5 // pred_region
        %s832 = ssub.s32 %s22, 2
        // Predicated region
        $region61: #{awq_observer_forward.1} parent=59 // pred_check
          %p833 = pneg %p163
        $region62: #{awq_observer_forward.1} parent=59 // pred_check_branch
          %835 = sbr.rel (%p833) target = $region64
        $region63: #{awq_observer_forward.1} parent=59 // pred_region
          %s836 = sand.u32 %s148, 1
          %s837 = scalar_lea.sflag [#allocation4], %s836
          %s838 = sand.u32 %s148, 1
          %s839 = smul.addr %s838, 256
          %s840 = scalar_lea.vmem [#allocation8], %s839
          %841 = dma.done %s837, 4096
        $region64: #{awq_observer_forward.1} parent=59 // pred_fallthru
          _
        // Predicated region
        $region65: #{awq_observer_forward.1} parent=59 // pred_check
          %p842 = pneg %p191
        $region66: #{awq_observer_forward.1} parent=59 // pred_check_branch
          %844 = sbr.rel (%p842) target = $region68
        $region67: #{awq_observer_forward.1} parent=59 // pred_region
          %s845 = sand.u32 %s176, 1
          %s846 = scalar_lea.sflag [#allocation10], %s845
          %s847 = sand.u32 %s176, 1
          %s848 = smul.addr %s847, 8
          %s849 = scalar_lea.vmem [#allocation9], %s848
          %850 = dma.done %s846, 128
        $region68: #{awq_observer_forward.1} parent=59 // pred_fallthru
          _
      $region60: #{awq_observer_forward.1} parent=5 // pred_fallthru
        _
    $region6: #{awq_observer_forward.1} parent=1 // loop_footer
      %s26 = sadd.s32 1, %s22
    $region7: #{awq_observer_forward.1} parent=1 // loop_footer_branch
      %21 = sbr.rel target = $region3
    $region8: #{awq_observer_forward.1} parent=1 // loop_exit
      _
    %851 = vsyncpa [#allocation3], 1
    %s852 = scalar_lea.sflag [#allocation3], 1
    %853 = vsyncpa %s852, 1
    %854 = vsyncpa [#allocation6], 1
    %855 = vsyncpa [#allocation4], 1
    %s856 = scalar_lea.sflag [#allocation4], 1
    %857 = vsyncpa %s856, 1
    %858 = vsyncpa [#allocation10], 1
    %s859 = scalar_lea.sflag [#allocation10], 1
    %860 = vsyncpa %s859, 1

</llo_original>
